<compile_context>
chip_gen: v5e
topology: v5e:2x2
jax: 0.10.0
libtpu: 0.0.40
codegen_flags: <defaults>
</compile_context>

<pallas_src>
import functools

import jax
import jax.numpy as jnp
from jax import lax
from jax.experimental import pallas as pl
from jax.experimental.pallas import tpu as pltpu

_K = 2  # top_k of the gate


def _round_up(x, m):
    return (x + m - 1) // m * m


def _gate_kernel(x_ref, w_ref, idx_ref, score_ref, psum_ref, fsum_ref, *,
                 n_tokens, e_real, tb):
    """One token tile of the SMoE gate.

    x_ref:     (tb, D)        activation tile (native dtype, no cast)
    w_ref:     (E_pad, D)     gate weight, zero-padded expert rows
    idx_ref:   (2, tb)  i32   top-k expert indices (lane-dense layout)
    score_ref: (2, tb)  f32   top-k router probabilities (lane-dense layout)
    psum_ref:  (1, E_pad, 1)  per-tile sum over tokens of router_probs
    fsum_ref:  (1, E_pad, 1)  per-tile sum over tokens of top-k one-hot counts
    """
    # logits^T = W @ X^T on the MXU, f32 accumulate: experts on sublanes,
    # tokens on lanes -> per-token results are naturally lane-dense rows.
    logits = lax.dot_general(
        w_ref[...], x_ref[...],
        dimension_numbers=(((1,), (1,)), ((), ())),
        preferred_element_type=jnp.float32)                    # (E_pad, tb)
    e_pad, nb = logits.shape
    expert = lax.broadcasted_iota(jnp.int32, (e_pad, nb), 0)
    neg_inf = jnp.float32(-jnp.inf)

    # Padded expert rows must never win the top-k.
    logits = jnp.where(expert < e_real, logits, neg_inf)

    # ---- top-1 (reduce over experts = sublane axis) ----
    max1 = jnp.max(logits, axis=0, keepdims=True)              # (1, tb)
    idx1 = jnp.min(jnp.where(logits == max1, expert, e_pad),
                   axis=0, keepdims=True)                      # (1, tb)
    eq1 = expert == idx1
    # ---- top-2 (mask out the first winner) ----
    masked = jnp.where(eq1, neg_inf, logits)
    max2 = jnp.max(masked, axis=0, keepdims=True)
    idx2 = jnp.min(jnp.where(masked == max2, expert, e_pad),
                   axis=0, keepdims=True)
    idx2 = jnp.minimum(idx2, e_real - 1)     # guard degenerate e_real < 2
    eq2 = expert == idx2

    # softmax over the scattered top-2 logits == softmax({max1, max2}).
    e2 = jnp.exp(max2 - max1)
    s1 = 1.0 / (1.0 + e2)
    s2 = e2 * s1

    # Lane-dense stores (torch.topk sorted=False -> descending order emitted).
    idx_ref[...] = jnp.concatenate([idx1, idx2], axis=0)
    score_ref[...] = jnp.concatenate([s1, s2], axis=0)

    # ---- per-tile partial statistics for the aux load-balance loss ----
    col = pl.program_id(0) * tb + lax.broadcasted_iota(jnp.int32, (1, nb), 1)
    valid = (col < n_tokens).astype(jnp.float32)               # pad-token mask
    s1v = s1 * valid
    s2v = s2 * valid
    probs = jnp.where(eq1, s1v, 0.0) + jnp.where(eq2, s2v, 0.0)   # (E_pad, tb)
    counts = jnp.where(eq1, valid, 0.0) + jnp.where(eq2, valid, 0.0)

    psum_ref[0] = probs.sum(axis=1, keepdims=True)             # (E_pad, 1)
    fsum_ref[0] = counts.sum(axis=1, keepdims=True)


def _vmem_budget_bytes():
    """Generation-aware VMEM budget for the kernel."""
    try:
        cap = int(pltpu.get_tpu_info().vmem_capacity_bytes)
    except Exception:
        cap = 64 * 2**20          # conservative fallback (v7x-sized)
    if cap <= 64 * 2**20:
        # v7x-class: 64 MiB physical per TC; leave headroom for compiler
        # internal scratch and DMA descriptors.
        return 48 * 2**20
    # 128 MiB parts (v5e/v6e): allow large tiles, keep ~16 MiB headroom.
    return min(cap - 16 * 2**20, 112 * 2**20)


def _vmem_estimate(tb, d, e_pad, x_itemsize, w_itemsize):
    return (2 * tb * d * x_itemsize        # double-buffered activation tile
            + 2 * e_pad * d * w_itemsize   # weight (2x in case of fallback)
            + 8 * tb * e_pad * 4           # f32 logits + select/temp passes
            + 2 * 2 * _K * tb * 4          # idx/score output buffers
            + 2 * 2 * e_pad * 4)           # psum/fsum output buffers


@functools.partial(
    jax.jit, static_argnames=("tb", "vmem_limit", "single_buffer_weight"))
def _forward_impl(inp, gate_w, *, tb, vmem_limit, single_buffer_weight):
    n, d = inp.shape
    e = gate_w.shape[0]
    k = _K
    n_pad = _round_up(n, tb)
    e_pad = _round_up(e, 8)
    num_tiles = n_pad // tb

    x = inp if n_pad == n else jnp.pad(inp, ((0, n_pad - n), (0, 0)))
    w = gate_w.astype(inp.dtype)           # keep the MXU operands cast-free
    if e_pad != e:
        w = jnp.pad(w, ((0, e_pad - e), (0, 0)))

    kernel = functools.partial(_gate_kernel, n_tokens=n, e_real=e, tb=tb)

    if single_buffer_weight:
        # Constant index_map -> double-buffering the weight only wastes VMEM.
        w_spec = pl.BlockSpec((e_pad, d), lambda i: (0, 0),
                              pipeline_mode=pl.Buffered(1))
    else:
        w_spec = pl.BlockSpec((e_pad, d), lambda i: (0, 0))

    cost = pl.CostEstimate(
        flops=2 * n_pad * d * e_pad,
        transcendentals=n_pad,
        bytes_accessed=(n_pad * d * x.dtype.itemsize
                        + e_pad * d * w.dtype.itemsize
                        + 2 * k * n_pad * 4
                        + 2 * num_tiles * e_pad * 4),
    )

    idx_t, score_t, psum, fsum = pl.pallas_call(
        kernel,
        out_shape=(
            jax.ShapeDtypeStruct((k, n_pad), jnp.int32),
            jax.ShapeDtypeStruct((k, n_pad), jnp.float32),
            jax.ShapeDtypeStruct((num_tiles, e_pad, 1), jnp.float32),
            jax.ShapeDtypeStruct((num_tiles, e_pad, 1), jnp.float32),
        ),
        grid_spec=pltpu.PrefetchScalarGridSpec(
            num_scalar_prefetch=0,
            grid=(num_tiles,),
            in_specs=[
                pl.BlockSpec((tb, d), lambda i: (i, 0)),
                w_spec,
            ],
            out_specs=[
                pl.BlockSpec((k, tb), lambda i: (0, i)),
                pl.BlockSpec((k, tb), lambda i: (0, i)),
                pl.BlockSpec((1, e_pad, 1), lambda i: (i, 0, 0)),
                pl.BlockSpec((1, e_pad, 1), lambda i: (i, 0, 0)),
            ],
        ),
        compiler_params=pltpu.CompilerParams(
            dimension_semantics=("parallel",),
            vmem_limit_bytes=int(vmem_limit),
        ),
        cost_estimate=cost,
    )(x, w)

    # Lane-dense (k, N) -> (N, k): tiny glue transposes.
    idx = idx_t[:, :n].T
    scores = score_t[:, :n].T

    # Aux load-balance loss from O(num_tiles * E) partial sums.
    inv_n = 1.0 / n
    p_i = psum.sum(axis=(0, 2))[:e] * inv_n   # mean router_probs over tokens
    f_i = fsum.sum(axis=(0, 2))[:e] * inv_n   # mean per-token expert counts
    aux_loss = (f_i * p_i).sum() * e

    return idx, scores, aux_loss


_SINGLE_BUFFER_WEIGHT_OK = None   # lazily probed: pl.Buffered(1) support


def smoe_gate_forward(inp, gate_w, token_block=None):
    """Pallas implementation of CustomNaiveGate_Balance_SMoE.forward (top_k=2).

    Args:
      inp:    (N, d_model) activations. The kernel is HBM-bound on this read on
              all TPU generations; feed bf16 from upstream for ~2x (do NOT cast
              here -- that would add a full extra HBM pass).
      gate_w: (tot_expert, d_model) gate nn.Linear weight (bias-free).
      token_block: optional token tile size (multiple of 128). Default: auto
              (512 for f32, 1024 for <=16-bit activations, shrunk to fit the
              generation-aware VMEM budget).
    Returns:
      (top_k_indices (N, 2) int32, top_k_scores (N, 2) f32, aux balance loss)
    """
    global _SINGLE_BUFFER_WEIGHT_OK
    n, d = inp.shape
    e = gate_w.shape[0]
    e_pad = _round_up(e, 8)
    budget = _vmem_budget_bytes()

    if token_block is None:
        tb = 1024 if inp.dtype.itemsize <= 2 else 512
        while tb > 128 and _vmem_estimate(tb, d, e_pad, inp.dtype.itemsize,
                                          inp.dtype.itemsize) > budget:
            tb //= 2
    else:
        assert token_block % 128 == 0, "token_block must be a multiple of 128"
        tb = token_block
    # Tiny inputs: shrink the tile to the (8-aligned) token count so every
    # block spans the full padded array extent.
    tb = min(tb, _round_up(n, 8))

    kwargs = dict(tb=tb, vmem_limit=int(budget))

    if _SINGLE_BUFFER_WEIGHT_OK is None:
        try:
            out = _forward_impl(inp, gate_w, single_buffer_weight=True, **kwargs)
            jax.block_until_ready(out)
            _SINGLE_BUFFER_WEIGHT_OK = True
            return out
        except Exception:
            _SINGLE_BUFFER_WEIGHT_OK = False
    return _forward_impl(inp, gate_w,
                         single_buffer_weight=bool(_SINGLE_BUFFER_WEIGHT_OK),
                         **kwargs)


def _reference(inp, gate_w):
    """Pure-JAX reference mirroring the PyTorch forward (top_k=2)."""
    logits = inp.astype(jnp.float32) @ gate_w.T.astype(jnp.float32)
    n, e = logits.shape
    top_v, top_i = lax.top_k(logits, 2)
    router = jnp.full_like(logits, -jnp.inf)
    router = router.at[jnp.arange(n)[:, None], top_i].set(top_v)
    router = jax.nn.softmax(router, axis=-1)
    scores = jnp.take_along_axis(router, top_i, axis=-1)
    one_hot = jax.nn.one_hot(top_i, e, dtype=jnp.float32).sum(axis=1)
    f_i = one_hot.mean(axis=0)
    p_i = router.mean(axis=0)
    aux = (f_i * p_i).sum() * e
    return top_i.astype(jnp.int32), scores, aux


if __name__ == "__main__":
    # Small config: d_model=32, num_expert=8, world_size=1 -> tot_expert=8,
    # top_k=2, tokens N = batch(2) * seq(8) = 16.
    d_model, num_expert, world_size = 32, 8, 1
    tot_expert = num_expert * world_size
    batch, seq = 2, 8
    n_tokens = batch * seq

    key = jax.random.PRNGKey(0)
    kx, kw = jax.random.split(key)
    x = jax.random.normal(kx, (n_tokens, d_model), dtype=jnp.float32)
    # nn.Linear(d_model, tot_expert, bias=False): weight (tot_expert, d_model)
    gate_w = jax.random.normal(kw, (tot_expert, d_model),
                               dtype=jnp.float32) * 0.1

    idx, scores, aux_loss = smoe_gate_forward(x, gate_w)
    jax.block_until_ready((idx, scores, aux_loss))

    # Sanity check against the pure-JAX reference (order-insensitive, since
    # torch.topk(..., sorted=False) leaves the top-k order unspecified).
    ref_idx, ref_scores, ref_aux = _reference(x, gate_w)
    order = jnp.argsort(idx, axis=-1)
    ref_order = jnp.argsort(ref_idx, axis=-1)
    assert jnp.array_equal(jnp.take_along_axis(idx, order, axis=-1),
                           jnp.take_along_axis(ref_idx, ref_order, axis=-1))
    assert jnp.allclose(jnp.take_along_axis(scores, order, axis=-1),
                        jnp.take_along_axis(ref_scores, ref_order, axis=-1),
                        atol=1e-5, rtol=1e-5)
    assert jnp.allclose(aux_loss, ref_aux, atol=1e-5, rtol=1e-5)

    print("KERNEL_OK")
</pallas_src>

<mosaic_0001>
module attributes {stable_mosaic.version = 11 : i64} {
  func.func @_gate_kernel(%arg0: i32, %arg1: memref<16x32xf32, #tpu.memory_space<vmem>>, %arg2: memref<8x32xf32, #tpu.memory_space<vmem>>, %arg3: memref<2x16xi32, #tpu.memory_space<vmem>>, %arg4: memref<2x16xf32, #tpu.memory_space<vmem>>, %arg5: memref<1x8x1xf32, #tpu.memory_space<vmem>>, %arg6: memref<1x8x1xf32, #tpu.memory_space<vmem>>) attributes {dimension_semantics = [#tpu.dimension_semantics<parallel>], iteration_bounds = array<i64: 1>, scalar_prefetch = 0 : i64, scratch_operands = 0 : i64, tpu.core_type = #tpu.core_type<tc>, window_params = [{transform_indices = @transform_0, window_bounds = array<i64: 16, 32>}, {pipeline_mode = #tpu.pipeline_mode<synchronous>, transform_indices = @transform_1, window_bounds = array<i64: 8, 32>}, {transform_indices = @transform_2, window_bounds = array<i64: 2, 16>}, {transform_indices = @transform_3, window_bounds = array<i64: 2, 16>}, {transform_indices = @transform_4, window_bounds = array<i64: 1, 8, 1>}, {transform_indices = @transform_5, window_bounds = array<i64: 1, 8, 1>}]} {
    %c0 = arith.constant 0 : index
    %c0_0 = arith.constant 0 : index
    %0 = vector.load %arg2[%c0, %c0_0] : memref<8x32xf32, #tpu.memory_space<vmem>>, vector<8x32xf32>
    %c0_1 = arith.constant 0 : index
    %c0_2 = arith.constant 0 : index
    %1 = vector.load %arg1[%c0_1, %c0_2] : memref<16x32xf32, #tpu.memory_space<vmem>>, vector<16x32xf32>
    %cst = arith.constant dense<0.000000e+00> : vector<8x16xf32>
    %2 = tpu.matmul %0, %1, %cst {dimension_numbers = #tpu.dot_dimension_numbers<[1], [1], [0], [0], [0, 0, 1, 0], [], []>} : vector<8x32xf32>, vector<16x32xf32>, vector<8x16xf32> -> vector<8x16xf32>
    %3 = tpu.iota {dimensions = array<i32: 0>} : vector<8x16xi32>
    %c8_i32 = arith.constant 8 : i32
    %4 = vector.broadcast %c8_i32 : i32 to vector<8x16xi32>
    %5 = arith.cmpi slt, %3, %4 : vector<8x16xi32>
    %cst_3 = arith.constant 0xFF800000 : f32
    %6 = vector.broadcast %cst_3 : f32 to vector<8x16xf32>
    %7 = arith.select %5, %2, %6 : vector<8x16xi1>, vector<8x16xf32>
    %cst_4 = arith.constant dense<0xFF800000> : vector<16xf32>
    %8 = vector.multi_reduction <maximumf>, %7, %cst_4 [0] : vector<8x16xf32> to vector<16xf32>
    %9 = vector.shape_cast %8 : vector<16xf32> to vector<1x16xf32>
    %10 = vector.broadcast %9 : vector<1x16xf32> to vector<8x16xf32>
    %11 = arith.cmpf oeq, %7, %10 : vector<8x16xf32>
    %c8_i32_5 = arith.constant 8 : i32
    %12 = vector.broadcast %c8_i32_5 : i32 to vector<8x16xi32>
    %13 = arith.select %11, %3, %12 : vector<8x16xi1>, vector<8x16xi32>
    %cst_6 = arith.constant dense<2147483647> : vector<16xi32>
    %14 = vector.multi_reduction <minsi>, %13, %cst_6 [0] : vector<8x16xi32> to vector<16xi32>
    %15 = vector.shape_cast %14 : vector<16xi32> to vector<1x16xi32>
    %16 = vector.broadcast %15 : vector<1x16xi32> to vector<8x16xi32>
    %17 = arith.cmpi eq, %3, %16 : vector<8x16xi32>
    %cst_7 = arith.constant 0xFF800000 : f32
    %18 = vector.broadcast %cst_7 : f32 to vector<8x16xf32>
    %19 = arith.select %17, %18, %7 : vector<8x16xi1>, vector<8x16xf32>
    %cst_8 = arith.constant dense<0xFF800000> : vector<16xf32>
    %20 = vector.multi_reduction <maximumf>, %19, %cst_8 [0] : vector<8x16xf32> to vector<16xf32>
    %21 = vector.shape_cast %20 : vector<16xf32> to vector<1x16xf32>
    %22 = vector.broadcast %21 : vector<1x16xf32> to vector<8x16xf32>
    %23 = arith.cmpf oeq, %19, %22 : vector<8x16xf32>
    %c8_i32_9 = arith.constant 8 : i32
    %24 = vector.broadcast %c8_i32_9 : i32 to vector<8x16xi32>
    %25 = arith.select %23, %3, %24 : vector<8x16xi1>, vector<8x16xi32>
    %cst_10 = arith.constant dense<2147483647> : vector<16xi32>
    %26 = vector.multi_reduction <minsi>, %25, %cst_10 [0] : vector<8x16xi32> to vector<16xi32>
    %27 = vector.shape_cast %26 : vector<16xi32> to vector<1x16xi32>
    %c7_i32 = arith.constant 7 : i32
    %28 = vector.broadcast %c7_i32 : i32 to vector<1x16xi32>
    %29 = arith.minsi %27, %28 : vector<1x16xi32>
    %30 = vector.broadcast %29 : vector<1x16xi32> to vector<8x16xi32>
    %31 = arith.cmpi eq, %3, %30 : vector<8x16xi32>
    %32 = arith.subf %21, %9 : vector<1x16xf32>
    %33 = math.exp %32 : vector<1x16xf32>
    %cst_11 = arith.constant 1.000000e+00 : f32
    %34 = vector.broadcast %cst_11 : f32 to vector<1x16xf32>
    %35 = arith.addf %34, %33 : vector<1x16xf32>
    %cst_12 = arith.constant 1.000000e+00 : f32
    %36 = vector.broadcast %cst_12 : f32 to vector<1x16xf32>
    %37 = arith.divf %36, %35 : vector<1x16xf32>
    %38 = arith.mulf %33, %37 : vector<1x16xf32>
    %39 = tpu.concatenate %15, %29 in 0 : vector<1x16xi32>, vector<1x16xi32> -> vector<2x16xi32>
    %c0_13 = arith.constant 0 : index
    %c0_14 = arith.constant 0 : index
    %40 = vector.load %arg3[%c0_13, %c0_14] : memref<2x16xi32, #tpu.memory_space<vmem>>, vector<2x16xi32>
    tpu.vector_store %arg3[%c0_13, %c0_14], %39 {strides = array<i32>} : memref<2x16xi32, #tpu.memory_space<vmem>>, vector<2x16xi32>,
    %41 = tpu.concatenate %37, %38 in 0 : vector<1x16xf32>, vector<1x16xf32> -> vector<2x16xf32>
    %c0_15 = arith.constant 0 : index
    %c0_16 = arith.constant 0 : index
    %42 = vector.load %arg4[%c0_15, %c0_16] : memref<2x16xf32, #tpu.memory_space<vmem>>, vector<2x16xf32>
    tpu.vector_store %arg4[%c0_15, %c0_16], %41 {strides = array<i32>} : memref<2x16xf32, #tpu.memory_space<vmem>>, vector<2x16xf32>,
    %c16_i32 = arith.constant 16 : i32
    %43 = arith.muli %arg0, %c16_i32 : i32
    %44 = tpu.iota {dimensions = array<i32: 1>} : vector<1x16xi32>
    %45 = vector.broadcast %43 : i32 to vector<1x16xi32>
    %46 = arith.addi %45, %44 : vector<1x16xi32>
    %c16_i32_17 = arith.constant 16 : i32
    %47 = vector.broadcast %c16_i32_17 : i32 to vector<1x16xi32>
    %48 = arith.cmpi slt, %46, %47 : vector<1x16xi32>
    %49 = arith.extui %48 : vector<1x16xi1> to vector<1x16xi32>
    %50 = arith.sitofp %49 : vector<1x16xi32> to vector<1x16xf32>
    %51 = arith.mulf %37, %50 : vector<1x16xf32>
    %52 = arith.mulf %38, %50 : vector<1x16xf32>
    %cst_18 = arith.constant 0.000000e+00 : f32
    %53 = vector.shape_cast %51 : vector<1x16xf32> to vector<1x16xf32>
    %54 = vector.broadcast %53 : vector<1x16xf32> to vector<8x16xf32>
    %55 = vector.broadcast %cst_18 : f32 to vector<8x16xf32>
    %56 = arith.select %17, %54, %55 : vector<8x16xi1>, vector<8x16xf32>
    %cst_19 = arith.constant 0.000000e+00 : f32
    %57 = vector.shape_cast %52 : vector<1x16xf32> to vector<1x16xf32>
    %58 = vector.broadcast %57 : vector<1x16xf32> to vector<8x16xf32>
    %59 = vector.broadcast %cst_19 : f32 to vector<8x16xf32>
    %60 = arith.select %31, %58, %59 : vector<8x16xi1>, vector<8x16xf32>
    %61 = arith.addf %56, %60 : vector<8x16xf32>
    %cst_20 = arith.constant 0.000000e+00 : f32
    %62 = vector.shape_cast %50 : vector<1x16xf32> to vector<1x16xf32>
    %63 = vector.broadcast %62 : vector<1x16xf32> to vector<8x16xf32>
    %64 = vector.broadcast %cst_20 : f32 to vector<8x16xf32>
    %65 = arith.select %17, %63, %64 : vector<8x16xi1>, vector<8x16xf32>
    %cst_21 = arith.constant 0.000000e+00 : f32
    %66 = vector.shape_cast %50 : vector<1x16xf32> to vector<1x16xf32>
    %67 = vector.broadcast %66 : vector<1x16xf32> to vector<8x16xf32>
    %68 = vector.broadcast %cst_21 : f32 to vector<8x16xf32>
    %69 = arith.select %31, %67, %68 : vector<8x16xi1>, vector<8x16xf32>
    %70 = arith.addf %65, %69 : vector<8x16xf32>
    %cst_22 = arith.constant dense<0.000000e+00> : vector<8xf32>
    %71 = vector.multi_reduction <add>, %61, %cst_22 [1] : vector<8x16xf32> to vector<8xf32>
    %72 = vector.shape_cast %71 : vector<8xf32> to vector<8x1xf32>
    %c0_23 = arith.constant 0 : index
    %c0_24 = arith.constant 0 : index
    %c0_25 = arith.constant 0 : index
    %73 = vector.load %arg5[%c0_23, %c0_24, %c0_25] : memref<1x8x1xf32, #tpu.memory_space<vmem>>, vector<1x8x1xf32>
    %74 = vector.shape_cast %73 : vector<1x8x1xf32> to vector<8x1xf32>
    %75 = vector.shape_cast %72 : vector<8x1xf32> to vector<1x8x1xf32>
    tpu.vector_store %arg5[%c0_23, %c0_24, %c0_25], %75 {strides = array<i32>} : memref<1x8x1xf32, #tpu.memory_space<vmem>>, vector<1x8x1xf32>,
    %cst_26 = arith.constant dense<0.000000e+00> : vector<8xf32>
    %76 = vector.multi_reduction <add>, %70, %cst_26 [1] : vector<8x16xf32> to vector<8xf32>
    %77 = vector.shape_cast %76 : vector<8xf32> to vector<8x1xf32>
    %c0_27 = arith.constant 0 : index
    %c0_28 = arith.constant 0 : index
    %c0_29 = arith.constant 0 : index
    %78 = vector.load %arg6[%c0_27, %c0_28, %c0_29] : memref<1x8x1xf32, #tpu.memory_space<vmem>>, vector<1x8x1xf32>
    %79 = vector.shape_cast %78 : vector<1x8x1xf32> to vector<8x1xf32>
    %80 = vector.shape_cast %77 : vector<8x1xf32> to vector<1x8x1xf32>
    tpu.vector_store %arg6[%c0_27, %c0_28, %c0_29], %80 {strides = array<i32>} : memref<1x8x1xf32, #tpu.memory_space<vmem>>, vector<1x8x1xf32>,
    return
  }
  func.func @transform_0(%arg0: i32) -> (i32, i32) {
    %c0_i32 = arith.constant 0 : i32
    %c0_i32_0 = arith.constant 0 : i32
    return %arg0, %c0_i32 : i32, i32
  }
  func.func @transform_1(%arg0: i32) -> (i32, i32) {
    %c0_i32 = arith.constant 0 : i32
    %c0_i32_0 = arith.constant 0 : i32
    %c0_i32_1 = arith.constant 0 : i32
    return %c0_i32, %c0_i32_0 : i32, i32
  }
  func.func @transform_2(%arg0: i32) -> (i32, i32) {
    %c0_i32 = arith.constant 0 : i32
    %c0_i32_0 = arith.constant 0 : i32
    return %c0_i32, %arg0 : i32, i32
  }
  func.func @transform_3(%arg0: i32) -> (i32, i32) {
    %c0_i32 = arith.constant 0 : i32
    %c0_i32_0 = arith.constant 0 : i32
    return %c0_i32, %arg0 : i32, i32
  }
  func.func @transform_4(%arg0: i32) -> (i32, i32, i32) {
    %c0_i32 = arith.constant 0 : i32
    %c0_i32_0 = arith.constant 0 : i32
    %c0_i32_1 = arith.constant 0 : i32
    return %arg0, %c0_i32, %c0_i32_0 : i32, i32, i32
  }
  func.func @transform_5(%arg0: i32) -> (i32, i32, i32) {
    %c0_i32 = arith.constant 0 : i32
    %c0_i32_0 = arith.constant 0 : i32
    %c0_i32_1 = arith.constant 0 : i32
    return %arg0, %c0_i32, %c0_i32_0 : i32, i32, i32
  }
}

module attributes {stable_mosaic.version = 11 : i64} {
  func.func @_gate_kernel(%arg0: i32, %arg1: memref<16x32xf32, #tpu.memory_space<vmem>>, %arg2: memref<8x32xf32, #tpu.memory_space<vmem>>, %arg3: memref<2x16xi32, #tpu.memory_space<vmem>>, %arg4: memref<2x16xf32, #tpu.memory_space<vmem>>, %arg5: memref<1x8x1xf32, #tpu.memory_space<vmem>>, %arg6: memref<1x8x1xf32, #tpu.memory_space<vmem>>) attributes {dimension_semantics = [#tpu.dimension_semantics<parallel>], iteration_bounds = array<i64: 1>, scalar_prefetch = 0 : i64, scratch_operands = 0 : i64, tpu.core_type = #tpu.core_type<tc>, window_params = [{transform_indices = @transform_0, window_bounds = array<i64: 16, 32>}, {pipeline_mode = #tpu.pipeline_mode<synchronous>, transform_indices = @transform_1, window_bounds = array<i64: 8, 32>}, {transform_indices = @transform_2, window_bounds = array<i64: 2, 16>}, {transform_indices = @transform_3, window_bounds = array<i64: 2, 16>}, {transform_indices = @transform_4, window_bounds = array<i64: 1, 8, 1>}, {transform_indices = @transform_5, window_bounds = array<i64: 1, 8, 1>}]} {
    %c0 = arith.constant 0 : index
    %c0_0 = arith.constant 0 : index
    %0 = vector.load %arg2[%c0, %c0_0] : memref<8x32xf32, #tpu.memory_space<vmem>>, vector<8x32xf32>
    %c0_1 = arith.constant 0 : index
    %c0_2 = arith.constant 0 : index
    %1 = vector.load %arg1[%c0_1, %c0_2] : memref<16x32xf32, #tpu.memory_space<vmem>>, vector<16x32xf32>
    %cst = arith.constant dense<0.000000e+00> : vector<8x16xf32>
    %2 = tpu.matmul %0, %1, %cst {dimension_numbers = #tpu.dot_dimension_numbers<[1], [1], [0], [0], [0, 0, 1, 0], [], []>} : vector<8x32xf32>, vector<16x32xf32>, vector<8x16xf32> -> vector<8x16xf32>
    %3 = tpu.iota {dimensions = array<i32: 0>} : vector<8x16xi32>
    %c8_i32 = arith.constant 8 : i32
    %4 = vector.broadcast %c8_i32 : i32 to vector<8x16xi32>
    %5 = arith.cmpi slt, %3, %4 : vector<8x16xi32>
    %cst_3 = arith.constant 0xFF800000 : f32
    %6 = vector.broadcast %cst_3 : f32 to vector<8x16xf32>
    %7 = arith.select %5, %2, %6 : vector<8x16xi1>, vector<8x16xf32>
    %cst_4 = arith.constant dense<0xFF800000> : vector<16xf32>
    %8 = vector.multi_reduction <maximumf>, %7, %cst_4 [0] : vector<8x16xf32> to vector<16xf32>
    %9 = vector.shape_cast %8 : vector<16xf32> to vector<1x16xf32>
    %10 = vector.broadcast %9 : vector<1x16xf32> to vector<8x16xf32>
    %11 = arith.cmpf oeq, %7, %10 : vector<8x16xf32>
    %c8_i32_5 = arith.constant 8 : i32
    %12 = vector.broadcast %c8_i32_5 : i32 to vector<8x16xi32>
    %13 = arith.select %11, %3, %12 : vector<8x16xi1>, vector<8x16xi32>
    %cst_6 = arith.constant dense<2147483647> : vector<16xi32>
    %14 = vector.multi_reduction <minsi>, %13, %cst_6 [0] : vector<8x16xi32> to vector<16xi32>
    %15 = vector.shape_cast %14 : vector<16xi32> to vector<1x16xi32>
    %16 = vector.broadcast %15 : vector<1x16xi32> to vector<8x16xi32>
    %17 = arith.cmpi eq, %3, %16 : vector<8x16xi32>
    %cst_7 = arith.constant 0xFF800000 : f32
    %18 = vector.broadcast %cst_7 : f32 to vector<8x16xf32>
    %19 = arith.select %17, %18, %7 : vector<8x16xi1>, vector<8x16xf32>
    %cst_8 = arith.constant dense<0xFF800000> : vector<16xf32>
    %20 = vector.multi_reduction <maximumf>, %19, %cst_8 [0] : vector<8x16xf32> to vector<16xf32>
    %21 = vector.shape_cast %20 : vector<16xf32> to vector<1x16xf32>
    %22 = vector.broadcast %21 : vector<1x16xf32> to vector<8x16xf32>
    %23 = arith.cmpf oeq, %19, %22 : vector<8x16xf32>
    %c8_i32_9 = arith.constant 8 : i32
    %24 = vector.broadcast %c8_i32_9 : i32 to vector<8x16xi32>
    %25 = arith.select %23, %3, %24 : vector<8x16xi1>, vector<8x16xi32>
    %cst_10 = arith.constant dense<2147483647> : vector<16xi32>
    %26 = vector.multi_reduction <minsi>, %25, %cst_10 [0] : vector<8x16xi32> to vector<16xi32>
    %27 = vector.shape_cast %26 : vector<16xi32> to vector<1x16xi32>
    %c7_i32 = arith.constant 7 : i32
    %28 = vector.broadcast %c7_i32 : i32 to vector<1x16xi32>
    %29 = arith.minsi %27, %28 : vector<1x16xi32>
    %30 = vector.broadcast %29 : vector<1x16xi32> to vector<8x16xi32>
    %31 = arith.cmpi eq, %3, %30 : vector<8x16xi32>
    %32 = arith.subf %21, %9 : vector<1x16xf32>
    %33 = math.exp %32 : vector<1x16xf32>
    %cst_11 = arith.constant 1.000000e+00 : f32
    %34 = vector.broadcast %cst_11 : f32 to vector<1x16xf32>
    %35 = arith.addf %34, %33 : vector<1x16xf32>
    %cst_12 = arith.constant 1.000000e+00 : f32
    %36 = vector.broadcast %cst_12 : f32 to vector<1x16xf32>
    %37 = arith.divf %36, %35 : vector<1x16xf32>
    %38 = arith.mulf %33, %37 : vector<1x16xf32>
    %39 = tpu.concatenate %15, %29 in 0 : vector<1x16xi32>, vector<1x16xi32> -> vector<2x16xi32>
    %c0_13 = arith.constant 0 : index
    %c0_14 = arith.constant 0 : index
    %40 = vector.load %arg3[%c0_13, %c0_14] : memref<2x16xi32, #tpu.memory_space<vmem>>, vector<2x16xi32>
    tpu.vector_store %arg3[%c0_13, %c0_14], %39 {strides = array<i32>} : memref<2x16xi32, #tpu.memory_space<vmem>>, vector<2x16xi32>,
    %41 = tpu.concatenate %37, %38 in 0 : vector<1x16xf32>, vector<1x16xf32> -> vector<2x16xf32>
    %c0_15 = arith.constant 0 : index
    %c0_16 = arith.constant 0 : index
    %42 = vector.load %arg4[%c0_15, %c0_16] : memref<2x16xf32, #tpu.memory_space<vmem>>, vector<2x16xf32>
    tpu.vector_store %arg4[%c0_15, %c0_16], %41 {strides = array<i32>} : memref<2x16xf32, #tpu.memory_space<vmem>>, vector<2x16xf32>,
    %c16_i32 = arith.constant 16 : i32
    %43 = arith.muli %arg0, %c16_i32 : i32
    %44 = tpu.iota {dimensions = array<i32: 1>} : vector<1x16xi32>
    %45 = vector.broadcast %43 : i32 to vector<1x16xi32>
    %46 = arith.addi %45, %44 : vector<1x16xi32>
    %c16_i32_17 = arith.constant 16 : i32
    %47 = vector.broadcast %c16_i32_17 : i32 to vector<1x16xi32>
    %48 = arith.cmpi slt, %46, %47 : vector<1x16xi32>
    %49 = arith.extui %48 : vector<1x16xi1> to vector<1x16xi32>
    %50 = arith.sitofp %49 : vector<1x16xi32> to vector<1x16xf32>
    %51 = arith.mulf %37, %50 : vector<1x16xf32>
    %52 = arith.mulf %38, %50 : vector<1x16xf32>
    %cst_18 = arith.constant 0.000000e+00 : f32
    %53 = vector.shape_cast %51 : vector<1x16xf32> to vector<1x16xf32>
    %54 = vector.broadcast %53 : vector<1x16xf32> to vector<8x16xf32>
    %55 = vector.broadcast %cst_18 : f32 to vector<8x16xf32>
    %56 = arith.select %17, %54, %55 : vector<8x16xi1>, vector<8x16xf32>
    %cst_19 = arith.constant 0.000000e+00 : f32
    %57 = vector.shape_cast %52 : vector<1x16xf32> to vector<1x16xf32>
    %58 = vector.broadcast %57 : vector<1x16xf32> to vector<8x16xf32>
    %59 = vector.broadcast %cst_19 : f32 to vector<8x16xf32>
    %60 = arith.select %31, %58, %59 : vector<8x16xi1>, vector<8x16xf32>
    %61 = arith.addf %56, %60 : vector<8x16xf32>
    %cst_20 = arith.constant 0.000000e+00 : f32
    %62 = vector.shape_cast %50 : vector<1x16xf32> to vector<1x16xf32>
    %63 = vector.broadcast %62 : vector<1x16xf32> to vector<8x16xf32>
    %64 = vector.broadcast %cst_20 : f32 to vector<8x16xf32>
    %65 = arith.select %17, %63, %64 : vector<8x16xi1>, vector<8x16xf32>
    %cst_21 = arith.constant 0.000000e+00 : f32
    %66 = vector.shape_cast %50 : vector<1x16xf32> to vector<1x16xf32>
    %67 = vector.broadcast %66 : vector<1x16xf32> to vector<8x16xf32>
    %68 = vector.broadcast %cst_21 : f32 to vector<8x16xf32>
    %69 = arith.select %31, %67, %68 : vector<8x16xi1>, vector<8x16xf32>
    %70 = arith.addf %65, %69 : vector<8x16xf32>
    %cst_22 = arith.constant dense<0.000000e+00> : vector<8xf32>
    %71 = vector.multi_reduction <add>, %61, %cst_22 [1] : vector<8x16xf32> to vector<8xf32>
    %72 = vector.shape_cast %71 : vector<8xf32> to vector<8x1xf32>
    %c0_23 = arith.constant 0 : index
    %c0_24 = arith.constant 0 : index
    %c0_25 = arith.constant 0 : index
    %73 = vector.load %arg5[%c0_23, %c0_24, %c0_25] : memref<1x8x1xf32, #tpu.memory_space<vmem>>, vector<1x8x1xf32>
    %74 = vector.shape_cast %73 : vector<1x8x1xf32> to vector<8x1xf32>
    %75 = vector.shape_cast %72 : vector<8x1xf32> to vector<1x8x1xf32>
    tpu.vector_store %arg5[%c0_23, %c0_24, %c0_25], %75 {strides = array<i32>} : memref<1x8x1xf32, #tpu.memory_space<vmem>>, vector<1x8x1xf32>,
    %cst_26 = arith.constant dense<0.000000e+00> : vector<8xf32>
    %76 = vector.multi_reduction <add>, %70, %cst_26 [1] : vector<8x16xf32> to vector<8xf32>
    %77 = vector.shape_cast %76 : vector<8xf32> to vector<8x1xf32>
    %c0_27 = arith.constant 0 : index
    %c0_28 = arith.constant 0 : index
    %c0_29 = arith.constant 0 : index
    %78 = vector.load %arg6[%c0_27, %c0_28, %c0_29] : memref<1x8x1xf32, #tpu.memory_space<vmem>>, vector<1x8x1xf32>
    %79 = vector.shape_cast %78 : vector<1x8x1xf32> to vector<8x1xf32>
    %80 = vector.shape_cast %77 : vector<8x1xf32> to vector<1x8x1xf32>
    tpu.vector_store %arg6[%c0_27, %c0_28, %c0_29], %80 {strides = array<i32>} : memref<1x8x1xf32, #tpu.memory_space<vmem>>, vector<1x8x1xf32>,
    return
  }
  func.func @transform_0(%arg0: i32) -> (i32, i32) {
    %c0_i32 = arith.constant 0 : i32
    %c0_i32_0 = arith.constant 0 : i32
    return %arg0, %c0_i32 : i32, i32
  }
  func.func @transform_1(%arg0: i32) -> (i32, i32) {
    %c0_i32 = arith.constant 0 : i32
    %c0_i32_0 = arith.constant 0 : i32
    %c0_i32_1 = arith.constant 0 : i32
    return %c0_i32, %c0_i32_0 : i32, i32
  }
  func.func @transform_2(%arg0: i32) -> (i32, i32) {
    %c0_i32 = arith.constant 0 : i32
    %c0_i32_0 = arith.constant 0 : i32
    return %c0_i32, %arg0 : i32, i32
  }
  func.func @transform_3(%arg0: i32) -> (i32, i32) {
    %c0_i32 = arith.constant 0 : i32
    %c0_i32_0 = arith.constant 0 : i32
    return %c0_i32, %arg0 : i32, i32
  }
  func.func @transform_4(%arg0: i32) -> (i32, i32, i32) {
    %c0_i32 = arith.constant 0 : i32
    %c0_i32_0 = arith.constant 0 : i32
    %c0_i32_1 = arith.constant 0 : i32
    return %arg0, %c0_i32, %c0_i32_0 : i32, i32, i32
  }
  func.func @transform_5(%arg0: i32) -> (i32, i32, i32) {
    %c0_i32 = arith.constant 0 : i32
    %c0_i32_0 = arith.constant 0 : i32
    %c0_i32_1 = arith.constant 0 : i32
    return %arg0, %c0_i32, %c0_i32_0 : i32, i32, i32
  }
}

</mosaic_0001>

<llo_original>
// kernel: _forward_impl.1
$region0: #{_forward_impl.1}
  #allocation0 [shape = 'u32[]', space=smem, size = 0x4, offset = 0x4, fixed_abs, tag = 'smem constant byte address 0x4 - core index']
  #allocation1 [shape = 'u32[72,128]{1,0:T(1,128)}', space=vmem, size = 0x9000, scoped, tag = 'internal scratch']
  %s0 = inlined_call_operand.hbm [shape: f32[16,32], index: 0, kind: input, shape index: {}]
  %s1 = inlined_call_operand.hbm [shape: f32[8,32], index: 1, kind: input, shape index: {}]
  %s2 = inlined_call_operand.hbm [shape: s32[2,16], index: 2, kind: output, shape index: {0}]
  %s3 = inlined_call_operand.hbm [shape: f32[2,16], index: 3, kind: output, shape index: {1}]
  %s4 = inlined_call_operand.vmem [shape: f32[1,8,1], index: 4, kind: output, shape index: {2}]
  %s5 = inlined_call_operand.vmem [shape: f32[1,8,1], index: 5, kind: output, shape index: {3}]
  %6 = xla_tuple %s2, %s3, %s4, %s5
  %s7 = sld [smem:[#allocation0]]
  $region50: #{_forward_impl.1} parent=0
    _
  %s9 = ssub.s32 1, %s7
  %s10 = scalar_select 0, %s9, %s7
  $region1: #{_forward_impl.1} parent=0
    #allocation2 [shape = 'u8[8192]{0}', space=vmem, size = 0x2000, scoped, tag = 'input window, operand 0, single buffered']
    #allocation3 [shape = 's32[1]{0}', space=sflag, size = 0x4, scoped, tag = 'scoped memory for _forward_impl.1']
    #allocation4 [shape = 's32[1]{0}', space=sflag, size = 0x4, scoped, tag = 'scoped memory for _forward_impl.1']
    #allocation5 [shape = 'u8[4096]{0}', space=vmem, size = 0x1000, scoped, tag = 'input window, operand 1, single buffered']
    #allocation6 [shape = 's32[1]{0}', space=sflag, size = 0x4, scoped, tag = 'scoped memory for _forward_impl.1']
    #allocation7 [shape = 'u8[1024]{0}', space=vmem, size = 0x400, scoped, tag = 'output window, operand 0, single buffered']
    #allocation8 [shape = 'u8[1024]{0}', space=vmem, size = 0x400, scoped, tag = 'output window, operand 1, single buffered']
    #allocation9 [shape = 's32[1]{0}', space=sflag, size = 0x4, scoped, tag = 'scoped memory for _forward_impl.1']
    %11 = vsyncpa [#allocation3], 0
    %12 = vsyncpa [#allocation6], 0
    %13 = vsyncpa [#allocation4], 0
    %14 = vsyncpa [#allocation9], 0
    // Predicated region
    $region2: #{_forward_impl.1} parent=1 // pred_check
      _
    $region3: #{_forward_impl.1} parent=1 // pred_check_branch
      %16 = sbr.rel (0) target = $region5
    $region4: #{_forward_impl.1} parent=1 // pred_region
      %18 = vsyncadd [#allocation3], 0
      %s19 = sshll.u32 %s0, 4
      %s20 = int_to_ptr.hbm [resolvable:$true] %s19
      %s21 = sshll.u32 [#allocation2], 4
      %s22 = int_to_ptr.vmem [resolvable:$true] %s21
      %27 = dma.hbm_to_vmem [thread:$0]  %s20, 256, %s22, [#allocation3], 128, 128, 8
    $region5: #{_forward_impl.1} parent=1 // pred_fallthru
      _
    // Predicated region
    $region6: #{_forward_impl.1} parent=1 // pred_check
      _
    $region7: #{_forward_impl.1} parent=1 // pred_check_branch
      %29 = sbr.rel (0) target = $region9
    $region8: #{_forward_impl.1} parent=1 // pred_region
      %31 = vsyncadd [#allocation6], 0
      %s33 = sshll.u32 %s1, 4
      %s34 = int_to_ptr.hbm [resolvable:$true] %s33
      %s35 = sshll.u32 [#allocation5], 4
      %s36 = int_to_ptr.vmem [resolvable:$true] %s35
      %38 = dma.hbm_to_vmem [thread:$0]  %s34, 128, %s36, [#allocation6]
    $region9: #{_forward_impl.1} parent=1 // pred_fallthru
      _
    // Predicated region
    $region10: #{_forward_impl.1} parent=1 // pred_check
      _
    $region11: #{_forward_impl.1} parent=1 // pred_check_branch
      %40 = sbr.rel (0) target = $region13
    $region12: #{_forward_impl.1} parent=1 // pred_region
      %42 = dma.done [#allocation3], 256
    $region13: #{_forward_impl.1} parent=1 // pred_fallthru
      _
    // Predicated region
    $region14: #{_forward_impl.1} parent=1 // pred_check
      _
    $region15: #{_forward_impl.1} parent=1 // pred_check_branch
      %44 = sbr.rel (0) target = $region17
    $region16: #{_forward_impl.1} parent=1 // pred_region
      %46 = dma.done [#allocation6], 128
    $region17: #{_forward_impl.1} parent=1 // pred_fallthru
      _
    %v47 = vld [vmem:[#allocation5] sm:$0xff]
    %v48 = vld [vmem:[#allocation2] sm:$0xff]
    %v49 = vld [vmem:[#allocation2 + $0x8] sm:$0xff]
    %vm50 = vcmask 261120
    %v52 = vsel %vm50, %v47, 0
    %v55 = vsel %vm50, %v48, 0
    %v58 = vsel %vm50, %v49, 0
    %60 = vmatpush.xpose.msra.mxu0 0.0
    %61 = vmatpush.xpose.msra.mxu0 0.0
    %62 = vmatpush.xpose.msra.mxu0 0.0
    %63 = vmatpush.xpose.msra.mxu0 0.0
    %64 = vmatpush.xpose.msra.mxu0 0.0
    %65 = vmatpush.xpose.msra.mxu0 0.0
    %66 = vmatpush.xpose.msra.mxu0 0.0
    %67 = vmatpush.xpose.msra.mxu0 0.0
    %68 = vmatpush.xpose.msra.mxu0 0.0
    %69 = vmatpush.xpose.msra.mxu0 0.0
    %70 = vmatpush.xpose.msra.mxu0 0.0
    %71 = vmatpush.xpose.msra.mxu0 0.0
    %72 = vmatpush.xpose.msra.mxu0 0.0
    %73 = vmatpush.xpose.msra.mxu0 0.0
    %74 = vmatpush.xpose.msra.mxu0 %v58
    %75 = vmatpush.xpose.msra.mxu0 %v55
    %76 = vmatmul.f32.gmra.mxu0 %v52
    %v77 = vpop.f32.mrf.mxu0
    %v78 = vadd.f32 0.0, %v77
    %79 = vdwg.mxu0
    %v80 = vlaneseq
    %v81 = vshrl.u32 %v80, 7
    %vm82 = vcmp.lt.s32.totalorder %v81, 8
    %v83 = vsel %vm82, %v78, -inf
    %vm84 = vcmask 130048
    %v85 = vsel %vm84, %v83, -inf
    %v86 = vrot.slane %v85, 4
    %v87 = vmax.f32 %v85, %v86
    %v88 = vrot.slane %v87, 2
    %v89 = vmax.f32 %v87, %v88
    %v90 = vrot.slane %v89, 1
    %v91 = vmax.f32 %v89, %v90
    %vm92 = vcmp.eq.f32.partialorder %v83, %v91
    %v93 = vsel %vm92, %v81, 8
    %v94 = vsel %vm84, %v93, 2147483647
    %v95 = vrot.slane %v94, 4
    %vm96 = vcmp.lt.s32.totalorder %v94, %v95
    %v97 = vsel %vm96, %v94, %v95
    %v98 = vrot.slane %v97, 2
    %vm99 = vcmp.lt.s32.totalorder %v97, %v98
    %v100 = vsel %vm99, %v97, %v98
    %v101 = vrot.slane %v100, 1
    %vm102 = vcmp.lt.s32.totalorder %v100, %v101
    %v103 = vsel %vm102, %v100, %v101
    %vm104 = vcmp.eq.s32.totalorder %v81, %v103
    %v105 = vsel %vm104, -inf, %v83
    %v106 = vsel %vm84, %v105, -inf
    %v107 = vrot.slane %v106, 4
    %v108 = vmax.f32 %v106, %v107
    %v109 = vrot.slane %v108, 2
    %v110 = vmax.f32 %v108, %v109
    %v111 = vrot.slane %v110, 1
    %v112 = vmax.f32 %v110, %v111
    %vm113 = vcmp.eq.f32.partialorder %v105, %v112
    %v114 = vsel %vm113, %v81, 8
    %v115 = vsel %vm84, %v114, 2147483647
    %v116 = vrot.slane %v115, 4
    %vm117 = vcmp.lt.s32.totalorder %v115, %v116
    %v118 = vsel %vm117, %v115, %v116
    %v119 = vrot.slane %v118, 2
    %vm120 = vcmp.lt.s32.totalorder %v118, %v119
    %v121 = vsel %vm120, %v118, %v119
    %v122 = vrot.slane %v121, 1
    %vm123 = vcmp.lt.s32.totalorder %v121, %v122
    %v124 = vsel %vm123, %v121, %v122
    %vm125 = vcmp.lt.s32.totalorder %v124, 7
    %v126 = vsel %vm125, %v124, 7
    %vm127 = vcmp.eq.s32.totalorder %v81, %v126
    %v128 = vsub.f32 %v112, %v91
    %v129 = vmul.f32 %v128, 1.442695
    %v130 = vpow.pop %v129
    %v131 = vadd.f32 %v130, 1.0
    %v132 = vrcp.pop %v131
    %v133 = vmul.f32 %v131, %v132
    %v134 = vsub.f32 1.0, %v133
    %v135 = vmul.f32 %v132, %v134
    %v136 = vadd.f32 %v132, %v135
    %vm137 = vweird.f32 %v131
    %vm138 = vweird.f32 %v132
    %vm139 = vmor %vm137, %vm138
    %v140 = vsel %vm139, %v132, %v136
    %v141 = vand.u32 2147483647, %v131
    %vm142 = vcmp.eq.f32.partialorder %v141, 8.507059e+37
    %v143 = vand.u32 %v131, 2147483648
    %v144 = vor.u32 1.1754944e-38, %v143
    %v145 = vsel %vm142, %v144, %v140
    %v146 = vmul.f32 1.0, %v145
    %v147 = vmul.f32 %v130, %v146
    %vm148 = vcmask 1040384
    %v149 = vsel %vm148, %v103, %v126
    %vm150 = vcmask 123904
    %151 = vst.msk [vmem:[#allocation7] sm:$0x3] %vm150, %v149
    %v152 = vsel %vm148, %v146, %v147
    %153 = vst.msk [vmem:[#allocation8] sm:$0x3] %vm150, %v152
    %s154 = smul.u32 0, 16
    %v155 = vlaneseq
    %v156 = vand.u32 %v155, 127
    %v157 = vstv %s154
    %v158 = vadd.s32 %v157, %v156
    %vm159 = vcmp.lt.s32.totalorder %v158, 16
    %v160 = vsel %vm159, 1, 0
    %v161 = vcvt.s32.f32 %v160
    %v162 = vmul.f32 %v146, %v161
    %v163 = vmul.f32 %v147, %v161
    %v164 = vsel %vm104, %v162, 0.0
    %v165 = vsel %vm127, %v163, 0.0
    %v166 = vadd.f32 %v164, %v165
    %v167 = vsel %vm104, %v161, 0.0
    %v168 = vsel %vm127, %v161, 0.0
    %v169 = vadd.f32 %v167, %v168
    %v170 = vsel %vm84, %v166, 0.0
    %171 = vadd.xlane.f32.xlu0 %v170
    %v172 = vpop.xlane.xlu0 %171
    %vm173 = vcmask 7168
    %174 = vst.msk [vmem:[%s4] sm:$0xff] %vm173, %v172
    %v175 = vsel %vm84, %v169, 0.0
    %176 = vadd.xlane.f32.xlu0 %v175
    %v177 = vpop.xlane.xlu0 %176
    %178 = vst.msk [vmem:[%s5] sm:$0xff] %vm173, %v177
    // Predicated region
    $region18: #{_forward_impl.1} parent=1 // pred_check
      _
    $region19: #{_forward_impl.1} parent=1 // pred_check_branch
      %180 = sbr.rel (0) target = $region21
    $region20: #{_forward_impl.1} parent=1 // pred_region
      %182 = vsyncadd [#allocation4], 0
      %s184 = sshll.u32 [#allocation7], 4
      %s185 = int_to_ptr.vmem [resolvable:$true] %s184
      %s186 = sshll.u32 %s2, 4
      %s187 = int_to_ptr.hbm [resolvable:$true] %s186
      %189 = dma.vmem_to_hbm [thread:$0]  %s185, 32, %s187, [#allocation4]
    $region21: #{_forward_impl.1} parent=1 // pred_fallthru
      _
    // Predicated region
    $region22: #{_forward_impl.1} parent=1 // pred_check
      _
    $region23: #{_forward_impl.1} parent=1 // pred_check_branch
      %191 = sbr.rel (0) target = $region25
    $region24: #{_forward_impl.1} parent=1 // pred_region
      %193 = vsyncadd [#allocation9], 0
      %s195 = sshll.u32 [#allocation8], 4
      %s196 = int_to_ptr.vmem [resolvable:$true] %s195
      %s197 = sshll.u32 %s3, 4
      %s198 = int_to_ptr.hbm [resolvable:$true] %s197
      %200 = dma.vmem_to_hbm [thread:$0]  %s196, 32, %s198, [#allocation9]
    $region25: #{_forward_impl.1} parent=1 // pred_fallthru
      _
    // Predicated region
    $region26: #{_forward_impl.1} parent=1 // pred_check
      _
    $region27: #{_forward_impl.1} parent=1 // pred_check_branch
      %202 = sbr.rel (0) target = $region29
    $region28: #{_forward_impl.1} parent=1 // pred_region
      _
    $region29: #{_forward_impl.1} parent=1 // pred_fallthru
      _
    // Predicated region
    $region30: #{_forward_impl.1} parent=1 // pred_check
      _
    $region31: #{_forward_impl.1} parent=1 // pred_check_branch
      %204 = sbr.rel (0) target = $region33
    $region32: #{_forward_impl.1} parent=1 // pred_region
      _
    $region33: #{_forward_impl.1} parent=1 // pred_fallthru
      _
    // Predicated region
    $region34: #{_forward_impl.1} parent=1 // pred_check
      _
    $region35: #{_forward_impl.1} parent=1 // pred_check_branch
      %206 = sbr.rel (0) target = $region37
    $region36: #{_forward_impl.1} parent=1 // pred_region
      %208 = dma.done [#allocation4], 32
    $region37: #{_forward_impl.1} parent=1 // pred_fallthru
      _
    // Predicated region
    $region38: #{_forward_impl.1} parent=1 // pred_check
      _
    $region39: #{_forward_impl.1} parent=1 // pred_check_branch
      %210 = sbr.rel (0) target = $region41
    $region40: #{_forward_impl.1} parent=1 // pred_region
      %212 = dma.done [#allocation9], 32
    $region41: #{_forward_impl.1} parent=1 // pred_fallthru
      _
    // Predicated region
    $region42: #{_forward_impl.1} parent=1 // pred_check
      _
    $region43: #{_forward_impl.1} parent=1 // pred_check_branch
      %214 = sbr.rel (0) target = $region45
    $region44: #{_forward_impl.1} parent=1 // pred_region
      _
    $region45: #{_forward_impl.1} parent=1 // pred_fallthru
      _
    // Predicated region
    $region46: #{_forward_impl.1} parent=1 // pred_check
      _
    $region47: #{_forward_impl.1} parent=1 // pred_check_branch
      %216 = sbr.rel (0) target = $region49
    $region48: #{_forward_impl.1} parent=1 // pred_region
      _
    $region49: #{_forward_impl.1} parent=1 // pred_fallthru
      _
    %217 = vsyncpa [#allocation3], 1
    %218 = vsyncpa [#allocation6], 1
    %219 = vsyncpa [#allocation4], 1
    %220 = vsyncpa [#allocation9], 1

// kernel: _forward_impl.1
$region0: #{_forward_impl.1}
  #allocation0 [shape = 'u32[]', space=smem, size = 0x4, offset = 0x4, fixed_abs, tag = 'smem constant byte address 0x4 - core index']
  #allocation1 [shape = 'u32[72,128]{1,0:T(1,128)}', space=vmem, size = 0x9000, scoped, tag = 'internal scratch']
  %s0 = inlined_call_operand.hbm [shape: f32[16,32], index: 0, kind: input, shape index: {}]
  %s1 = inlined_call_operand.hbm [shape: f32[8,32], index: 1, kind: input, shape index: {}]
  %s2 = inlined_call_operand.hbm [shape: s32[2,16], index: 2, kind: output, shape index: {0}]
  %s3 = inlined_call_operand.hbm [shape: f32[2,16], index: 3, kind: output, shape index: {1}]
  %s4 = inlined_call_operand.vmem [shape: f32[1,8,1], index: 4, kind: output, shape index: {2}]
  %s5 = inlined_call_operand.vmem [shape: f32[1,8,1], index: 5, kind: output, shape index: {3}]
  %6 = xla_tuple %s2, %s3, %s4, %s5
  %s7 = sld [smem:[#allocation0]]
  $region50: #{_forward_impl.1} parent=0
    _
  %s9 = ssub.s32 1, %s7
  %s10 = scalar_select 0, %s9, %s7
  $region1: #{_forward_impl.1} parent=0
    #allocation2 [shape = 'u8[8192]{0}', space=vmem, size = 0x2000, scoped, tag = 'input window, operand 0, single buffered']
    #allocation3 [shape = 's32[1]{0}', space=sflag, size = 0x4, scoped, tag = 'scoped memory for _forward_impl.1']
    #allocation4 [shape = 's32[1]{0}', space=sflag, size = 0x4, scoped, tag = 'scoped memory for _forward_impl.1']
    #allocation5 [shape = 'u8[4096]{0}', space=vmem, size = 0x1000, scoped, tag = 'input window, operand 1, single buffered']
    #allocation6 [shape = 's32[1]{0}', space=sflag, size = 0x4, scoped, tag = 'scoped memory for _forward_impl.1']
    #allocation7 [shape = 'u8[1024]{0}', space=vmem, size = 0x400, scoped, tag = 'output window, operand 0, single buffered']
    #allocation8 [shape = 'u8[1024]{0}', space=vmem, size = 0x400, scoped, tag = 'output window, operand 1, single buffered']
    #allocation9 [shape = 's32[1]{0}', space=sflag, size = 0x4, scoped, tag = 'scoped memory for _forward_impl.1']
    %11 = vsyncpa [#allocation3], 0
    %12 = vsyncpa [#allocation6], 0
    %13 = vsyncpa [#allocation4], 0
    %14 = vsyncpa [#allocation9], 0
    // Predicated region
    $region2: #{_forward_impl.1} parent=1 // pred_check
      _
    $region3: #{_forward_impl.1} parent=1 // pred_check_branch
      %16 = sbr.rel (0) target = $region5
    $region4: #{_forward_impl.1} parent=1 // pred_region
      %18 = vsyncadd [#allocation3], 0
      %s19 = sshll.u32 %s0, 4
      %s20 = int_to_ptr.hbm [resolvable:$true] %s19
      %s21 = sshll.u32 [#allocation2], 4
      %s22 = int_to_ptr.vmem [resolvable:$true] %s21
      %27 = dma.hbm_to_vmem [thread:$0]  %s20, 256, %s22, [#allocation3], 128, 128, 8
    $region5: #{_forward_impl.1} parent=1 // pred_fallthru
      _
    // Predicated region
    $region6: #{_forward_impl.1} parent=1 // pred_check
      _
    $region7: #{_forward_impl.1} parent=1 // pred_check_branch
      %29 = sbr.rel (0) target = $region9
    $region8: #{_forward_impl.1} parent=1 // pred_region
      %31 = vsyncadd [#allocation6], 0
      %s33 = sshll.u32 %s1, 4
      %s34 = int_to_ptr.hbm [resolvable:$true] %s33
      %s35 = sshll.u32 [#allocation5], 4
      %s36 = int_to_ptr.vmem [resolvable:$true] %s35
      %38 = dma.hbm_to_vmem [thread:$0]  %s34, 128, %s36, [#allocation6]
    $region9: #{_forward_impl.1} parent=1 // pred_fallthru
      _
    // Predicated region
    $region10: #{_forward_impl.1} parent=1 // pred_check
      _
    $region11: #{_forward_impl.1} parent=1 // pred_check_branch
      %40 = sbr.rel (0) target = $region13
    $region12: #{_forward_impl.1} parent=1 // pred_region
      %42 = dma.done [#allocation3], 256
    $region13: #{_forward_impl.1} parent=1 // pred_fallthru
      _
    // Predicated region
    $region14: #{_forward_impl.1} parent=1 // pred_check
      _
    $region15: #{_forward_impl.1} parent=1 // pred_check_branch
      %44 = sbr.rel (0) target = $region17
    $region16: #{_forward_impl.1} parent=1 // pred_region
      %46 = dma.done [#allocation6], 128
    $region17: #{_forward_impl.1} parent=1 // pred_fallthru
      _
    %v47 = vld [vmem:[#allocation5] sm:$0xff]
    %v48 = vld [vmem:[#allocation2] sm:$0xff]
    %v49 = vld [vmem:[#allocation2 + $0x8] sm:$0xff]
    %vm50 = vcmask 261120
    %v52 = vsel %vm50, %v47, 0
    %v55 = vsel %vm50, %v48, 0
    %v58 = vsel %vm50, %v49, 0
    %60 = vmatpush.xpose.msra.mxu0 0.0
    %61 = vmatpush.xpose.msra.mxu0 0.0
    %62 = vmatpush.xpose.msra.mxu0 0.0
    %63 = vmatpush.xpose.msra.mxu0 0.0
    %64 = vmatpush.xpose.msra.mxu0 0.0
    %65 = vmatpush.xpose.msra.mxu0 0.0
    %66 = vmatpush.xpose.msra.mxu0 0.0
    %67 = vmatpush.xpose.msra.mxu0 0.0
    %68 = vmatpush.xpose.msra.mxu0 0.0
    %69 = vmatpush.xpose.msra.mxu0 0.0
    %70 = vmatpush.xpose.msra.mxu0 0.0
    %71 = vmatpush.xpose.msra.mxu0 0.0
    %72 = vmatpush.xpose.msra.mxu0 0.0
    %73 = vmatpush.xpose.msra.mxu0 0.0
    %74 = vmatpush.xpose.msra.mxu0 %v58
    %75 = vmatpush.xpose.msra.mxu0 %v55
    %76 = vmatmul.f32.gmra.mxu0 %v52
    %v77 = vpop.f32.mrf.mxu0
    %v78 = vadd.f32 0.0, %v77
    %79 = vdwg.mxu0
    %v80 = vlaneseq
    %v81 = vshrl.u32 %v80, 7
    %vm82 = vcmp.lt.s32.totalorder %v81, 8
    %v83 = vsel %vm82, %v78, -inf
    %vm84 = vcmask 130048
    %v85 = vsel %vm84, %v83, -inf
    %v86 = vrot.slane %v85, 4
    %v87 = vmax.f32 %v85, %v86
    %v88 = vrot.slane %v87, 2
    %v89 = vmax.f32 %v87, %v88
    %v90 = vrot.slane %v89, 1
    %v91 = vmax.f32 %v89, %v90
    %vm92 = vcmp.eq.f32.partialorder %v83, %v91
    %v93 = vsel %vm92, %v81, 8
    %v94 = vsel %vm84, %v93, 2147483647
    %v95 = vrot.slane %v94, 4
    %vm96 = vcmp.lt.s32.totalorder %v94, %v95
    %v97 = vsel %vm96, %v94, %v95
    %v98 = vrot.slane %v97, 2
    %vm99 = vcmp.lt.s32.totalorder %v97, %v98
    %v100 = vsel %vm99, %v97, %v98
    %v101 = vrot.slane %v100, 1
    %vm102 = vcmp.lt.s32.totalorder %v100, %v101
    %v103 = vsel %vm102, %v100, %v101
    %vm104 = vcmp.eq.s32.totalorder %v81, %v103
    %v105 = vsel %vm104, -inf, %v83
    %v106 = vsel %vm84, %v105, -inf
    %v107 = vrot.slane %v106, 4
    %v108 = vmax.f32 %v106, %v107
    %v109 = vrot.slane %v108, 2
    %v110 = vmax.f32 %v108, %v109
    %v111 = vrot.slane %v110, 1
    %v112 = vmax.f32 %v110, %v111
    %vm113 = vcmp.eq.f32.partialorder %v105, %v112
    %v114 = vsel %vm113, %v81, 8
    %v115 = vsel %vm84, %v114, 2147483647
    %v116 = vrot.slane %v115, 4
    %vm117 = vcmp.lt.s32.totalorder %v115, %v116
    %v118 = vsel %vm117, %v115, %v116
    %v119 = vrot.slane %v118, 2
    %vm120 = vcmp.lt.s32.totalorder %v118, %v119
    %v121 = vsel %vm120, %v118, %v119
    %v122 = vrot.slane %v121, 1
    %vm123 = vcmp.lt.s32.totalorder %v121, %v122
    %v124 = vsel %vm123, %v121, %v122
    %vm125 = vcmp.lt.s32.totalorder %v124, 7
    %v126 = vsel %vm125, %v124, 7
    %vm127 = vcmp.eq.s32.totalorder %v81, %v126
    %v128 = vsub.f32 %v112, %v91
    %v129 = vmul.f32 %v128, 1.442695
    %v130 = vpow.pop %v129
    %v131 = vadd.f32 %v130, 1.0
    %v132 = vrcp.pop %v131
    %v133 = vmul.f32 %v131, %v132
    %v134 = vsub.f32 1.0, %v133
    %v135 = vmul.f32 %v132, %v134
    %v136 = vadd.f32 %v132, %v135
    %vm137 = vweird.f32 %v131
    %vm138 = vweird.f32 %v132
    %vm139 = vmor %vm137, %vm138
    %v140 = vsel %vm139, %v132, %v136
    %v141 = vand.u32 2147483647, %v131
    %vm142 = vcmp.eq.f32.partialorder %v141, 8.507059e+37
    %v143 = vand.u32 %v131, 2147483648
    %v144 = vor.u32 1.1754944e-38, %v143
    %v145 = vsel %vm142, %v144, %v140
    %v146 = vmul.f32 1.0, %v145
    %v147 = vmul.f32 %v130, %v146
    %vm148 = vcmask 1040384
    %v149 = vsel %vm148, %v103, %v126
    %vm150 = vcmask 123904
    %151 = vst.msk [vmem:[#allocation7] sm:$0x3] %vm150, %v149
    %v152 = vsel %vm148, %v146, %v147
    %153 = vst.msk [vmem:[#allocation8] sm:$0x3] %vm150, %v152
    %s154 = smul.u32 0, 16
    %v155 = vlaneseq
    %v156 = vand.u32 %v155, 127
    %v157 = vstv %s154
    %v158 = vadd.s32 %v157, %v156
    %vm159 = vcmp.lt.s32.totalorder %v158, 16
    %v160 = vsel %vm159, 1, 0
    %v161 = vcvt.s32.f32 %v160
    %v162 = vmul.f32 %v146, %v161
    %v163 = vmul.f32 %v147, %v161
    %v164 = vsel %vm104, %v162, 0.0
    %v165 = vsel %vm127, %v163, 0.0
    %v166 = vadd.f32 %v164, %v165
    %v167 = vsel %vm104, %v161, 0.0
    %v168 = vsel %vm127, %v161, 0.0
    %v169 = vadd.f32 %v167, %v168
    %v170 = vsel %vm84, %v166, 0.0
    %171 = vadd.xlane.f32.xlu0 %v170
    %v172 = vpop.xlane.xlu0 %171
    %vm173 = vcmask 7168
    %174 = vst.msk [vmem:[%s4] sm:$0xff] %vm173, %v172
    %v175 = vsel %vm84, %v169, 0.0
    %176 = vadd.xlane.f32.xlu0 %v175
    %v177 = vpop.xlane.xlu0 %176
    %178 = vst.msk [vmem:[%s5] sm:$0xff] %vm173, %v177
    // Predicated region
    $region18: #{_forward_impl.1} parent=1 // pred_check
      _
    $region19: #{_forward_impl.1} parent=1 // pred_check_branch
      %180 = sbr.rel (0) target = $region21
    $region20: #{_forward_impl.1} parent=1 // pred_region
      %182 = vsyncadd [#allocation4], 0
      %s184 = sshll.u32 [#allocation7], 4
      %s185 = int_to_ptr.vmem [resolvable:$true] %s184
      %s186 = sshll.u32 %s2, 4
      %s187 = int_to_ptr.hbm [resolvable:$true] %s186
      %189 = dma.vmem_to_hbm [thread:$0]  %s185, 32, %s187, [#allocation4]
    $region21: #{_forward_impl.1} parent=1 // pred_fallthru
      _
    // Predicated region
    $region22: #{_forward_impl.1} parent=1 // pred_check
      _
    $region23: #{_forward_impl.1} parent=1 // pred_check_branch
      %191 = sbr.rel (0) target = $region25
    $region24: #{_forward_impl.1} parent=1 // pred_region
      %193 = vsyncadd [#allocation9], 0
      %s195 = sshll.u32 [#allocation8], 4
      %s196 = int_to_ptr.vmem [resolvable:$true] %s195
      %s197 = sshll.u32 %s3, 4
      %s198 = int_to_ptr.hbm [resolvable:$true] %s197
      %200 = dma.vmem_to_hbm [thread:$0]  %s196, 32, %s198, [#allocation9]
    $region25: #{_forward_impl.1} parent=1 // pred_fallthru
      _
    // Predicated region
    $region26: #{_forward_impl.1} parent=1 // pred_check
      _
    $region27: #{_forward_impl.1} parent=1 // pred_check_branch
      %202 = sbr.rel (0) target = $region29
    $region28: #{_forward_impl.1} parent=1 // pred_region
      _
    $region29: #{_forward_impl.1} parent=1 // pred_fallthru
      _
    // Predicated region
    $region30: #{_forward_impl.1} parent=1 // pred_check
      _
    $region31: #{_forward_impl.1} parent=1 // pred_check_branch
      %204 = sbr.rel (0) target = $region33
    $region32: #{_forward_impl.1} parent=1 // pred_region
      _
    $region33: #{_forward_impl.1} parent=1 // pred_fallthru
      _
    // Predicated region
    $region34: #{_forward_impl.1} parent=1 // pred_check
      _
    $region35: #{_forward_impl.1} parent=1 // pred_check_branch
      %206 = sbr.rel (0) target = $region37
    $region36: #{_forward_impl.1} parent=1 // pred_region
      %208 = dma.done [#allocation4], 32
    $region37: #{_forward_impl.1} parent=1 // pred_fallthru
      _
    // Predicated region
    $region38: #{_forward_impl.1} parent=1 // pred_check
      _
    $region39: #{_forward_impl.1} parent=1 // pred_check_branch
      %210 = sbr.rel (0) target = $region41
    $region40: #{_forward_impl.1} parent=1 // pred_region
      %212 = dma.done [#allocation9], 32
    $region41: #{_forward_impl.1} parent=1 // pred_fallthru
      _
    // Predicated region
    $region42: #{_forward_impl.1} parent=1 // pred_check
      _
    $region43: #{_forward_impl.1} parent=1 // pred_check_branch
      %214 = sbr.rel (0) target = $region45
    $region44: #{_forward_impl.1} parent=1 // pred_region
      _
    $region45: #{_forward_impl.1} parent=1 // pred_fallthru
      _
    // Predicated region
    $region46: #{_forward_impl.1} parent=1 // pred_check
      _
    $region47: #{_forward_impl.1} parent=1 // pred_check_branch
      %216 = sbr.rel (0) target = $region49
    $region48: #{_forward_impl.1} parent=1 // pred_region
      _
    $region49: #{_forward_impl.1} parent=1 // pred_fallthru
      _
    %217 = vsyncpa [#allocation3], 1
    %218 = vsyncpa [#allocation6], 1
    %219 = vsyncpa [#allocation4], 1
    %220 = vsyncpa [#allocation9], 1

</llo_original>
